<compile_context>
chip_gen: v6e
topology: v6e:2x2x1
jax: 0.10.0
libtpu: 0.0.40
codegen_flags: <defaults>
</compile_context>

<pallas_src>
import functools

import jax
import jax.numpy as jnp
from jax.experimental import pallas as pl
from jax.experimental.pallas import tpu as pltpu

_LANES = 128
_DEFAULT_TILE_ROWS = 2048        # 2048 x 128 f32 = 1 MiB per block
_SMALL_FAST_PATH_ELEMS = 4096    # below this, launch overhead dominates -> pure JAX


def _round_up(x: int, m: int) -> int:
    return ((x + m - 1) // m) * m


def _sublane_multiple(dtype) -> int:
    """Native sublane packing: 8 rows for 4-byte, 16 for 2-byte, 32 for 1-byte."""
    return max(8, 32 // max(jnp.dtype(dtype).itemsize, 1))


def _activate(out_f32, task: str):
    if task == 'binary':
        # Exact sigmoid via tanh identity: one EUP transcendental per vreg.
        return 0.5 * (jnp.tanh(0.5 * out_f32) + 1.0)
    return out_f32


def _prediction_kernel(*refs, use_bias: bool, task: str):
    """Elementwise hot path on one lane-dense (tile_r, 128) tile."""
    if use_bias:
        bias_ref, x_ref, o_ref = refs
    else:
        x_ref, o_ref = refs
    out = x_ref[...].astype(jnp.float32)        # math in f32 even for bf16 inputs
    if use_bias:
        out = out + bias_ref[0]                 # scalar bias from SMEM, broadcast
    o_ref[...] = _activate(out, task).astype(o_ref.dtype)


def prediction_layer(x, bias=None, *, task='binary', use_bias=True,
                     tile_rows=_DEFAULT_TILE_ROWS,
                     small_fast_path_elems=_SMALL_FAST_PATH_ELEMS):
    """JAX wrapper mirroring PredictionLayer.forward for any-shaped x."""
    if task not in ('binary', 'multiclass', 'regression'):
        raise ValueError('task must be binary,multiclass or regression')

    # Pure identity (no bias, no sigmoid): nothing to do at all.
    if not use_bias and task != 'binary':
        return x

    if use_bias:
        if bias is None:
            bias = jnp.zeros((1,), dtype=jnp.float32)
        bias = jnp.asarray(bias, dtype=jnp.float32).reshape((1,))

    orig_shape = x.shape
    n = x.size

    # Tiny inputs (canonical (B, 1) logits): a standalone kernel is pure launch
    # overhead — leave the epilogue to XLA so it fuses into the producing op.
    if n <= small_fast_path_elems:
        out = x.astype(jnp.float32)
        if use_bias:
            out = out + bias[0]
        if task == 'binary':
            out = jax.nn.sigmoid(out)
        return out.astype(x.dtype)

    # --- lane-dense re-layout: flatten, pad only to the sublane multiple -------
    sub = _sublane_multiple(x.dtype)
    rows = pl.cdiv(n, _LANES)
    padded_rows = _round_up(rows, sub)
    padded_n = padded_rows * _LANES
    needs_pad = padded_n != n

    flat = x.reshape(-1)
    if needs_pad:
        flat = jnp.pad(flat, (0, padded_n - n))
    slab = flat.reshape(padded_rows, _LANES)

    # --- tile sizing: big tiles amortize the per-grid-step overhead, but cap so
    # the grid has >= 2 steps whenever possible (both v7x TensorCores get work).
    tile_r = _round_up(max(int(tile_rows), sub), sub)
    two_way_cap = _round_up(pl.cdiv(padded_rows, 2), sub)
    tile_r = min(tile_r, max(two_way_cap, sub), padded_rows)
    grid = (pl.cdiv(padded_rows, tile_r),)       # partial last block masked by Pallas

    tile_spec = pl.BlockSpec((tile_r, _LANES), lambda i: (i, 0))
    kernel = functools.partial(_prediction_kernel, use_bias=use_bias, task=task)

    if use_bias:
        in_specs = [pl.BlockSpec(memory_space=pltpu.SMEM), tile_spec]
        args = (bias, slab)
        io_aliases = {1: 0}                      # slab (dead intermediate) -> output
    else:
        in_specs = [tile_spec]
        args = (slab,)
        io_aliases = {0: 0}

    out_slab = pl.pallas_call(
        kernel,
        out_shape=jax.ShapeDtypeStruct((padded_rows, _LANES), x.dtype),
        grid=grid,
        in_specs=in_specs,
        out_specs=tile_spec,
        input_output_aliases=io_aliases,
        compiler_params=pltpu.CompilerParams(
            dimension_semantics=("parallel",),   # shard row tiles across TCs (v7x)
        ),
    )(*args)

    if needs_pad:
        return out_slab.reshape(-1)[:n].reshape(orig_shape)
    return out_slab.reshape(orig_shape)


if __name__ == "__main__":
    key = jax.random.PRNGKey(0)
    k1, k2, k3 = jax.random.split(key, 3)

    # --- case 1: canonical (B, 1) logits — tiny, fused fast path --------------
    x1 = jax.random.normal(k1, (16, 1), dtype=jnp.float32)
    b1 = jnp.asarray([0.1], dtype=jnp.float32)
    out1 = jax.block_until_ready(prediction_layer(x1, b1, task='binary', use_bias=True))
    ref1 = jax.nn.sigmoid(x1 + b1[0])
    assert out1.shape == x1.shape
    assert jnp.allclose(out1, ref1, atol=1e-6), "binary fast-path mismatch"

    # --- case 2: kernel path, f32, non-lane-aligned size (pad + partial block) -
    x2 = jax.random.normal(k2, (48, 130), dtype=jnp.float32)   # 6240 elements
    b2 = jnp.asarray([0.25], dtype=jnp.float32)
    out2 = jax.block_until_ready(prediction_layer(x2, b2, task='binary', use_bias=True))
    ref2 = jax.nn.sigmoid(x2 + b2[0])
    assert out2.shape == x2.shape
    assert jnp.allclose(out2, ref2, atol=1e-5, rtol=1e-4), "binary kernel mismatch"

    # --- case 3: kernel path, bf16 (16-row sublane multiple), lane-aligned ----
    x3 = jax.random.normal(k3, (64, 128), dtype=jnp.float32).astype(jnp.bfloat16)
    b3 = jnp.asarray([0.5], dtype=jnp.float32)
    out3 = jax.block_until_ready(prediction_layer(x3, b3, task='binary', use_bias=True))
    ref3 = jax.nn.sigmoid(x3.astype(jnp.float32) + b3[0]).astype(jnp.bfloat16)
    assert out3.dtype == jnp.bfloat16 and out3.shape == x3.shape
    assert jnp.allclose(out3.astype(jnp.float32), ref3.astype(jnp.float32),
                        atol=1e-2), "bf16 binary kernel mismatch"

    # --- case 4: regression + bias (no sigmoid), kernel path ------------------
    out4 = jax.block_until_ready(
        prediction_layer(x2, b2, task='regression', use_bias=True))
    assert jnp.allclose(out4, x2 + b2[0], atol=1e-6), "regression mismatch"

    # --- case 5: identity fast path (no kernel, no copy) ----------------------
    out5 = prediction_layer(x2, None, task='regression', use_bias=False)
    assert jnp.array_equal(out5, x2), "identity fast-path mismatch"

    print("KERNEL_OK")
</pallas_src>

<mosaic_0001>
module attributes {stable_mosaic.version = 11 : i64} {
  func.func @_prediction_kernel(%arg0: i32, %arg1: memref<1xf32, #tpu.memory_space<smem>>, %arg2: memref<32x128xf32, #tpu.memory_space<vmem>>, %arg3: memref<32x128xf32, #tpu.memory_space<vmem>>) attributes {dimension_semantics = [#tpu.dimension_semantics<parallel>], iteration_bounds = array<i64: 2>, scalar_prefetch = 0 : i64, scratch_operands = 0 : i64, tpu.core_type = #tpu.core_type<tc>, window_params = [{transform_indices = @transform_0, window_bounds = array<i64: 1>}, {transform_indices = @transform_1, window_bounds = array<i64: 32, 128>}, {transform_indices = @transform_2, window_bounds = array<i64: 32, 128>}]} {
    %c0 = arith.constant 0 : index
    %c0_0 = arith.constant 0 : index
    %0 = vector.load %arg2[%c0, %c0_0] : memref<32x128xf32, #tpu.memory_space<vmem>>, vector<32x128xf32>
    %c0_1 = arith.constant 0 : index
    %1 = memref.load %arg1[%c0_1] : memref<1xf32, #tpu.memory_space<smem>>
    %2 = vector.broadcast %1 : f32 to vector<32x128xf32>
    %3 = arith.addf %0, %2 : vector<32x128xf32>
    %cst = arith.constant 5.000000e-01 : f32
    %4 = vector.broadcast %cst : f32 to vector<32x128xf32>
    %5 = arith.mulf %4, %3 : vector<32x128xf32>
    %6 = math.tanh %5 : vector<32x128xf32>
    %cst_2 = arith.constant 1.000000e+00 : f32
    %7 = vector.broadcast %cst_2 : f32 to vector<32x128xf32>
    %8 = arith.addf %6, %7 : vector<32x128xf32>
    %cst_3 = arith.constant 5.000000e-01 : f32
    %9 = vector.broadcast %cst_3 : f32 to vector<32x128xf32>
    %10 = arith.mulf %9, %8 : vector<32x128xf32>
    %c0_4 = arith.constant 0 : index
    %c0_5 = arith.constant 0 : index
    %11 = vector.load %arg3[%c0_4, %c0_5] : memref<32x128xf32, #tpu.memory_space<vmem>>, vector<32x128xf32>
    tpu.vector_store %arg3[%c0_4, %c0_5], %10 {strides = array<i32>} : memref<32x128xf32, #tpu.memory_space<vmem>>, vector<32x128xf32>,
    return
  }
  func.func @transform_0(%arg0: i32) -> i32 {
    %c0_i32 = arith.constant 0 : i32
    %c0_i32_0 = arith.constant 0 : i32
    return %c0_i32 : i32
  }
  func.func @transform_1(%arg0: i32) -> (i32, i32) {
    %c0_i32 = arith.constant 0 : i32
    %c0_i32_0 = arith.constant 0 : i32
    return %arg0, %c0_i32 : i32, i32
  }
  func.func @transform_2(%arg0: i32) -> (i32, i32) {
    %c0_i32 = arith.constant 0 : i32
    %c0_i32_0 = arith.constant 0 : i32
    return %arg0, %c0_i32 : i32, i32
  }
}

</mosaic_0001>

<llo_original>
// kernel: tpu_custom_call.1
$region0: #{tpu_custom_call.1}
  #allocation0 [shape = 'u32[]', space=smem, size = 0x4, offset = 0x4, fixed_abs, tag = 'smem constant byte address 0x4 - core index']
  #allocation1 [shape = 'u32[144,128]{1,0:T(1,128)}', space=vmem, size = 0x12000, scoped, tag = 'internal scratch']
  #allocation2 [shape = 'f32[1]{0:T(128)S(6)}', space=smem, size = 0x200, scoped, tag = 'scoped memory for tpu_custom_call.1']
  %s0 = inlined_call_operand.<no memory space> [shape: f32[1], index: 0, kind: input, shape index: {}]
  %s1 = inlined_call_operand.hbm [shape: f32[56,128], index: 1, kind: input, shape index: {}, may-alias: {1,2}]
  %s2 = inlined_call_operand.hbm [shape: f32[56,128], index: 2, kind: output, shape index: {}, may-alias: {1,2}]
  %s3 = sld [smem:[#allocation0]]
  $region45: #{tpu_custom_call.1} parent=0
    _
  %s5 = ssub.s32 1, %s3
  %s6 = scalar_select 0, %s5, %s3
  %7 = sst [smem:[#allocation2]] %s0
  $region1: #{tpu_custom_call.1} parent=0
    #allocation3 [shape = 'u8[32768]{0}', space=vmem, size = 0x8000, scoped, tag = 'input window, operand 1']
    #allocation4 [shape = 's32[2]{0}', space=sflag, size = 0x8, scoped, tag = 'scoped memory for tpu_custom_call.1']
    #allocation5 [shape = 's32[2]{0}', space=sflag, size = 0x8, scoped, tag = 'scoped memory for tpu_custom_call.1']
    #allocation6 [shape = 'u8[32768]{0}', space=vmem, size = 0x8000, scoped, tag = 'output window, operand 0']
    %8 = vsyncpa [#allocation4], 0
    %s9 = scalar_lea.sflag [#allocation4], 1
    %10 = vsyncpa %s9, 0
    %11 = vsyncpa [#allocation5], 0
    %s12 = scalar_lea.sflag [#allocation5], 1
    %13 = vsyncpa %s12, 0
    loop: start=0, step=1, limit=4
    $region2: #{tpu_custom_call.1} parent=1 // loop_pre_header
      _
    $region3: #{tpu_custom_call.1} parent=1 // loop_header
      %s15 = sphi 0, %s19
      %p16 = scmp.ge.s32.totalorder %s15, 4
      %s23 = sphi 0, %s23
      %s25 = sphi 0, %s23
      %s26 = sphi 0, %s25
      %s40 = sphi 0, %s26
      %s46 = sphi 0, %s48
      %s49 = sphi 0, %s46
      %s50 = sphi 0, %s49
      %s66 = sphi 0, %s50
      %s72 = sphi 0, %s74
      %s75 = sphi 0, %s72
      %s76 = sphi 0, %s75
      %s92 = sphi 0, %s76
    $region4: #{tpu_custom_call.1} parent=1 // loop_header_branch
      %18 = sbr.rel (%p16) target = $region8
    $region5: #{tpu_custom_call.1} parent=1 // loop_body
      %s20 = ssub.s32 %s15, 1
      %s21 = ssub.s32 %s15, 2
      %s22 = sadd.s32 %s15, 1
      %s24 = sadd.s32 %s23, 1
      %p27 = scmp.eq.s32.totalorder %s15, 1
      %p28 = scmp.ne.s32.totalorder %s23, %s25
      %p29 = scmp.eq.s32.totalorder %s15, 0
      %p30 = por %p28, %p29
      %p31 = scmp.ne.s32.totalorder %s23, %s25
      %p32 = scmp.eq.s32.totalorder %s20, 1
      %p33 = por %p31, %p32
      %p34 = scmp.ne.s32.totalorder %s25, %s26
      %p35 = scmp.eq.s32.totalorder %s20, 0
      %p36 = por %p34, %p35
      %p37 = scmp.ne.s32.totalorder %s25, %s26
      %p38 = scmp.eq.s32.totalorder %s21, 1
      %p39 = por %p37, %p38
      %p41 = scmp.ne.s32.totalorder %s26, %s40
      %p42 = scmp.eq.s32.totalorder %s21, 0
      %p43 = por %p41, %p42
      %s44 = ssub.s32 %s15, %s22
      %p45 = scmp.eq.s32.totalorder %s44, 0
      %s47 = sadd.s32 %s46, 1
      %s48 = scalar_select %p45, %s46, %s47
      %p51 = pneg %p45
      %p52 = scmp.eq.s32.totalorder %s15, 1
      %p53 = por %p51, %p52
      %p54 = scmp.ne.s32.totalorder %s46, %s49
      %p55 = scmp.eq.s32.totalorder %s15, 0
      %p56 = por %p54, %p55
      %p57 = scmp.ne.s32.totalorder %s46, %s49
      %p58 = scmp.eq.s32.totalorder %s20, 1
      %p59 = por %p57, %p58
      %p60 = scmp.ne.s32.totalorder %s49, %s50
      %p61 = scmp.eq.s32.totalorder %s20, 0
      %p62 = por %p60, %p61
      %p63 = scmp.ne.s32.totalorder %s49, %s50
      %p64 = scmp.eq.s32.totalorder %s21, 1
      %p65 = por %p63, %p64
      %p67 = scmp.ne.s32.totalorder %s50, %s66
      %p68 = scmp.eq.s32.totalorder %s21, 0
      %p69 = por %p67, %p68
      %s70 = ssub.s32 %s15, %s22
      %p71 = scmp.eq.s32.totalorder %s70, 0
      %s73 = sadd.s32 %s72, 1
      %s74 = scalar_select %p71, %s72, %s73
      %p77 = pneg %p71
      %p78 = scmp.eq.s32.totalorder %s15, 1
      %p79 = por %p77, %p78
      %p80 = scmp.ne.s32.totalorder %s72, %s75
      %p81 = scmp.eq.s32.totalorder %s15, 0
      %p82 = por %p80, %p81
      %p83 = scmp.ne.s32.totalorder %s72, %s75
      %p84 = scmp.eq.s32.totalorder %s20, 1
      %p85 = por %p83, %p84
      %p86 = scmp.ne.s32.totalorder %s75, %s76
      %p87 = scmp.eq.s32.totalorder %s20, 0
      %p88 = por %p86, %p87
      %p89 = scmp.ne.s32.totalorder %s75, %s76
      %p90 = scmp.eq.s32.totalorder %s21, 1
      %p91 = por %p89, %p90
      %p93 = scmp.ne.s32.totalorder %s76, %s92
      %p94 = scmp.eq.s32.totalorder %s21, 0
      %p95 = por %p93, %p94
      %p96 = scmp.le.s32.totalorder 1, %s15
      %p97 = scmp.lt.s32.totalorder %s15, 3
      %p98 = pnand %p96, %p97
      %p99 = pneg %p98
      // Predicated region
      $region9: #{tpu_custom_call.1} parent=5 // pred_check
        _
      $region10: #{tpu_custom_call.1} parent=5 // pred_check_branch
        %101 = sbr.rel (%p98) target = $region12
      $region11: #{tpu_custom_call.1} parent=5 // pred_region
        %s102 = ssub.s32 %s15, 1
        // Predicated region
        $region13: #{tpu_custom_call.1} parent=11 // pred_check
          %p103 = pneg %p36
        $region14: #{tpu_custom_call.1} parent=11 // pred_check_branch
          %105 = sbr.rel (%p103) target = $region16
        $region15: #{tpu_custom_call.1} parent=11 // pred_region
          _
        $region16: #{tpu_custom_call.1} parent=11 // pred_fallthru
          _
      $region12: #{tpu_custom_call.1} parent=5 // pred_fallthru
        _
      %p106 = scmp.lt.s32.totalorder %s15, 2
      // Predicated region
      $region17: #{tpu_custom_call.1} parent=5 // pred_check
        %p107 = pneg %p106
      $region18: #{tpu_custom_call.1} parent=5 // pred_check_branch
        %109 = sbr.rel (%p107) target = $region20
      $region19: #{tpu_custom_call.1} parent=5 // pred_region
        // Predicated region
        $region21: #{tpu_custom_call.1} parent=19 // pred_check
          %p110 = pneg %p56
        $region22: #{tpu_custom_call.1} parent=19 // pred_check_branch
          %112 = sbr.rel (%p110) target = $region24
        $region23: #{tpu_custom_call.1} parent=19 // pred_region
          %s113 = sand.u32 %s46, 1
          %s114 = scalar_lea.sflag [#allocation4], %s113
          %s115 = sand.u32 %s46, 1
          %s116 = smul.addr %s115, 32
          %s117 = scalar_lea.vmem [#allocation3], %s116
          %s118 = smul.u32 4, %s15
          %s119 = ssub.s32 7, %s118
          %p120 = scmp.lt.s32.totalorder %s119, 4
          %s121 = scalar_select %p120, %s119, 4
          %s122 = smul.u32 128, %s121
          %s124 = ssub.s32 512, %s122
          %125 = vsyncadd %s114, %s124
          %p126 = scmp.ne.s32.totalorder 0, %s122
          %s127 = smul.addr %s118, 128
          %s128 = scalar_lea.hbm %s1, %s127
          %s129 = smul.u32 8, %s121
          %s130 = sshll.u32 %s117, 4
          %s131 = int_to_ptr.vmem [resolvable:$true] %s130
          %s132 = sshll.u32 %s129, 4
          %136 = dma.hbm_to_vmem [thread:$0]  (%p126), %s128, %s132, %s131, %s114, 128, 128, 8
        $region24: #{tpu_custom_call.1} parent=19 // pred_fallthru
          _
      $region20: #{tpu_custom_call.1} parent=5 // pred_fallthru
        _
      %p137 = scmp.le.s32.totalorder 1, %s15
      %p138 = scmp.lt.s32.totalorder %s15, 3
      %p139 = pnand %p137, %p138
      %p140 = pneg %p139
      // Predicated region
      $region25: #{tpu_custom_call.1} parent=5 // pred_check
        _
      $region26: #{tpu_custom_call.1} parent=5 // pred_check_branch
        %142 = sbr.rel (%p139) target = $region28
      $region27: #{tpu_custom_call.1} parent=5 // pred_region
        %s143 = ssub.s32 %s15, 1
        %s144 = sand.u32 %s49, 1
        %s145 = scalar_lea.sflag [#allocation4], %s144
        %s146 = sand.u32 %s49, 1
        %s147 = smul.addr %s146, 32
        %s148 = scalar_lea.vmem [#allocation3], %s147
        // Predicated region
        $region29: #{tpu_custom_call.1} parent=27 // pred_check
          %p149 = pneg %p62
        $region30: #{tpu_custom_call.1} parent=27 // pred_check_branch
          %151 = sbr.rel (%p149) target = $region32
        $region31: #{tpu_custom_call.1} parent=27 // pred_region
          %152 = dma.done %s145, 512
        $region32: #{tpu_custom_call.1} parent=27 // pred_fallthru
          _
        %p153 = pneg %p36
        %p154 = pneg %p33
        %s155 = sand.u32 %s49, 1
        %s156 = scalar_lea.sflag [#allocation4], %s155
        %s157 = sand.u32 %s49, 1
        %s158 = smul.addr %s157, 32
        %s159 = scalar_lea.vmem [#allocation3], %s158
        %p160 = pneg %p62
        %p161 = pneg %p59
        %p162 = pneg %p88
        %p163 = pneg %p85
        %s164 = sand.u32 %s75, 1
        %s165 = scalar_lea.sflag [#allocation5], %s164
        %s166 = sand.u32 %s75, 1
        %s167 = smul.addr %s166, 32
        %s168 = scalar_lea.vmem [#allocation6], %s167
        %s169 = smul.u32 4, %s20
        %s170 = ssub.s32 7, %s169
        %p171 = scmp.lt.s32.totalorder %s170, 4
        %s172 = scalar_select %p171, %s170, 4
        %s173 = smul.u32 128, %s172
        %s174 = smul.u32 4, %s20
        %s175 = ssub.s32 7, %s174
        %p176 = scmp.lt.s32.totalorder %s175, 4
        %s177 = scalar_select %p176, %s175, 4
        %s178 = smul.u32 128, %s177
        %v179 = vld [vmem:[%s148] sm:$0xff]
        %v180 = vld [vmem:[%s148 + $0x8] sm:$0xff]
        %v181 = vld [vmem:[%s148 + $0x10] sm:$0xff]
        %v182 = vld [vmem:[%s148 + $0x18] sm:$0xff]
        %s183 = sld [smem:[#allocation2]]
        %v184 = vstv %s183
        %v185 = vadd.f32 %v179, %v184
        %v186 = vadd.f32 %v180, %v184
        %v187 = vadd.f32 %v181, %v184
        %v188 = vadd.f32 %v182, %v184
        %v189 = vmul.f32 %v185, 0.5
        %v190 = vmul.f32 %v186, 0.5
        %v191 = vmul.f32 %v187, 0.5
        %v192 = vmul.f32 %v188, 0.5
        %v193 = vtanh.pop %v189
        %v194 = vtanh.pop %v190
        %v195 = vtanh.pop %v191
        %v196 = vtanh.pop %v192
        %v197 = vadd.f32 %v193, 1.0
        %v198 = vadd.f32 %v194, 1.0
        %v199 = vadd.f32 %v195, 1.0
        %v200 = vadd.f32 %v196, 1.0
        %v201 = vmul.f32 %v197, 0.5
        %v202 = vmul.f32 %v198, 0.5
        %v203 = vmul.f32 %v199, 0.5
        %v204 = vmul.f32 %v200, 0.5
        %205 = vst [vmem:[%s168] sm:$0xff] %v201
        %206 = vst [vmem:[%s168 + $0x8] sm:$0xff] %v202
        %207 = vst [vmem:[%s168 + $0x10] sm:$0xff] %v203
        %208 = vst [vmem:[%s168 + $0x18] sm:$0xff] %v204
        %s209 = sand.u32 %s75, 1
        %s210 = scalar_lea.sflag [#allocation5], %s209
        %s211 = sand.u32 %s75, 1
        %s212 = smul.addr %s211, 32
        %s213 = scalar_lea.vmem [#allocation6], %s212
        // Predicated region
        $region33: #{tpu_custom_call.1} parent=27 // pred_check
          %p214 = pneg %p85
        $region34: #{tpu_custom_call.1} parent=27 // pred_check_branch
          %216 = sbr.rel (%p214) target = $region36
        $region35: #{tpu_custom_call.1} parent=27 // pred_region
          %s217 = smul.u32 4, %s20
          %s218 = ssub.s32 7, %s217
          %p219 = scmp.lt.s32.totalorder %s218, 4
          %s220 = scalar_select %p219, %s218, 4
          %s221 = smul.u32 128, %s220
          %s223 = ssub.s32 512, %s221
          %224 = vsyncadd %s210, %s223
          %p225 = scmp.ne.s32.totalorder 0, %s221
          %s226 = smul.addr %s217, 128
          %s227 = scalar_lea.hbm %s2, %s226
          %s228 = smul.u32 8, %s220
          %s229 = sshll.u32 %s213, 4
          %s230 = int_to_ptr.vmem [resolvable:$true] %s229
          %s231 = sshll.u32 %s228, 4
          %235 = dma.vmem_to_hbm [thread:$0]  (%p225), %s230, %s231, %s227, %s210, 128, 128, 8
        $region36: #{tpu_custom_call.1} parent=27 // pred_fallthru
          _
      $region28: #{tpu_custom_call.1} parent=5 // pred_fallthru
        _
      %p236 = scmp.le.s32.totalorder 2, %s15
      // Predicated region
      $region37: #{tpu_custom_call.1} parent=5 // pred_check
        %p237 = pneg %p236
      $region38: #{tpu_custom_call.1} parent=5 // pred_check_branch
        %239 = sbr.rel (%p237) target = $region40
      $region39: #{tpu_custom_call.1} parent=5 // pred_region
        %s240 = ssub.s32 %s15, 2
        // Predicated region
        $region41: #{tpu_custom_call.1} parent=39 // pred_check
          %p241 = pneg %p91
        $region42: #{tpu_custom_call.1} parent=39 // pred_check_branch
          %243 = sbr.rel (%p241) target = $region44
        $region43: #{tpu_custom_call.1} parent=39 // pred_region
          %s244 = sand.u32 %s76, 1
          %s245 = scalar_lea.sflag [#allocation5], %s244
          %s246 = sand.u32 %s76, 1
          %s247 = smul.addr %s246, 32
          %s248 = scalar_lea.vmem [#allocation6], %s247
          %249 = dma.done %s245, 512
        $region44: #{tpu_custom_call.1} parent=39 // pred_fallthru
          _
      $region40: #{tpu_custom_call.1} parent=5 // pred_fallthru
        _
    $region6: #{tpu_custom_call.1} parent=1 // loop_footer
      %s19 = sadd.s32 1, %s15
    $region7: #{tpu_custom_call.1} parent=1 // loop_footer_branch
      %14 = sbr.rel target = $region3
    $region8: #{tpu_custom_call.1} parent=1 // loop_exit
      _
    %250 = vsyncpa [#allocation4], 1
    %s251 = scalar_lea.sflag [#allocation4], 1
    %252 = vsyncpa %s251, 1
    %253 = vsyncpa [#allocation5], 1
    %s254 = scalar_lea.sflag [#allocation5], 1
    %255 = vsyncpa %s254, 1

</llo_original>
